<compile_context>
chip_gen: v5e
topology: v5e:2x2
jax: 0.10.0
libtpu: 0.0.40
codegen_flags: <defaults>
</compile_context>

<pallas_src>
import jax
import jax.numpy as jnp
from jax.experimental import pallas as pl
from jax.experimental.pallas import tpu as pltpu

N_CLASSES = 37   # pet_classify_model output classes
FEAT      = 128  # backbone head output (nn.Linear(in_features, 128))
HID       = 32   # synthetic trunk width standing in for swin in_features
D1        = 64   # dense1 output
NCAT      = N_CLASSES + HID


def _make_kernel(n_s, ts, s_total, ragged):
    """Build the kernel; n_s / ts / s_total / ragged are compile-time constants."""
    rem = s_total - (n_s - 1) * ts   # valid lanes in the last spatial tile

    def kernel(x_ref,                      # (rows=tb*C, ts) image tile
               sel_ref,                    # (tb, rows)      channel->batch sum matrix
               wbig_ref,                   # (rows, NCAT)    tile(Wcat) * (1/S)
               bcat_ref,                   # (1, NCAT)
               wh_ref, bh_ref,             # (HID, 128), (1, 128)
               wfa_ref, wfb_ref, bf_ref,   # dense1@dense2 folded: (128,1),(37,1),(1,1)
               out_ref,                    # (1, tb, 1)
               acc_ref):                   # scratch (rows, 1) f32 spatial-sum accumulator
        k = pl.program_id(1)

        @pl.when(k == 0)
        def _():
            acc_ref[...] = jnp.zeros_like(acc_ref)

        # Partial spatial sum for this tile.  One cross-lane reduce per tile (XLU
        # slot) -> hides under the image DMA.  No padded HBM copy is ever made; if
        # the last tile overruns S (ragged), the out-of-bounds lanes are masked.
        if ragged:
            @pl.when(k < n_s - 1)
            def _():
                acc_ref[...] += jnp.sum(x_ref[...], axis=-1, keepdims=True)

            @pl.when(k == n_s - 1)
            def _():
                lane = jax.lax.broadcasted_iota(jnp.int32, x_ref.shape, 1)
                xm = jnp.where(lane < rem, x_ref[...], 0.0)
                acc_ref[...] += jnp.sum(xm, axis=-1, keepdims=True)
        else:
            acc_ref[...] += jnp.sum(x_ref[...], axis=-1, keepdims=True)

        @pl.when(k == n_s - 1)
        def _():
            # pooled @ [Wp | Wt] without reshaping the (rows, 1) accumulator:
            #   logits[b, n] = sum_c acc[b*C + c] * Wcat[c, n] / S
            #   wbig = tile(Wcat, (tb, 1)) / S      (row r -> channel r % C)
            #   sel[b, r] = 1 iff r // C == b       (sums the C channel rows of batch b)
            m = acc_ref[...] * wbig_ref[...]                                   # (rows, NCAT)
            logits = jnp.dot(sel_ref[...], m,
                             preferred_element_type=jnp.float32) + bcat_ref[...]  # (tb, NCAT)

            # ---- pet_classify branch + softmax(dim=1) (exact division) ----
            p_logits = logits[:, :N_CLASSES]                                   # (tb, 37)
            p_max = jnp.max(p_logits, axis=-1, keepdims=True)
            p_exp = jnp.exp(p_logits - p_max)
            p = p_exp / jnp.sum(p_exp, axis=-1, keepdims=True)

            # ---- synthetic backbone trunk -> head Linear(HID, 128) ----
            feat = jnp.tanh(logits[:, N_CLASSES:])                             # (tb, HID)
            x128 = jnp.dot(feat, wh_ref[...],
                           preferred_element_type=jnp.float32) + bh_ref[...]   # (tb, 128)

            # dropout(0.1) is identity at inference.
            # cat([x128, p]) @ W1 @ W2 + (b1 @ W2 + b2), concat-free and with dense2
            # folded into dense1 offline (no nonlinearity between them).
            o = (jnp.dot(x128, wfa_ref[...], preferred_element_type=jnp.float32)
                 + jnp.dot(p, wfb_ref[...], preferred_element_type=jnp.float32)
                 + bf_ref[...])                                                # (tb, 1)
            out_ref[0, :, :] = jax.nn.sigmoid(o)

    return kernel


def init_params(key, channels):
    ks = jax.random.split(key, 12)
    s = 0.1
    wp  = s * jax.random.normal(ks[0],  (channels, N_CLASSES), jnp.float32)
    bp  = s * jax.random.normal(ks[1],  (1, N_CLASSES), jnp.float32)
    wt  = s * jax.random.normal(ks[2],  (channels, HID), jnp.float32)
    bt  = s * jax.random.normal(ks[3],  (1, HID), jnp.float32)
    wh  = s * jax.random.normal(ks[4],  (HID, FEAT), jnp.float32)
    bh  = s * jax.random.normal(ks[5],  (1, FEAT), jnp.float32)
    w1a = s * jax.random.normal(ks[6],  (FEAT, D1), jnp.float32)       # dense1 rows 0..127
    w1b = s * jax.random.normal(ks[7],  (N_CLASSES, D1), jnp.float32)  # dense1 rows 128..164
    b1  = s * jax.random.normal(ks[8],  (1, D1), jnp.float32)
    w2  = s * jax.random.normal(ks[9],  (D1, 1), jnp.float32)
    b2  = s * jax.random.normal(ks[10], (1, 1), jnp.float32)
    return (wp, bp, wt, bt, wh, bh, w1a, w1b, b1, w2, b2)


def _pick_batch_tile(batch, channels):
    """Smallest batch tile whose row count (tb*C) obeys the sublane-8 rule, capped at
    B//2 so the grid keeps >= 2 'parallel' batch tiles (v7x second TensorCore /
    megacore sharding).  Falls back to the whole batch (full-dim exemption)."""
    cap = batch // 2 if batch >= 2 else batch
    for tb in range(1, cap + 1):
        if batch % tb == 0 and (tb * channels) % 8 == 0:
            return tb
    return batch


def _pick_spatial_tile(s_total, rows, target_bytes):
    """Largest spatial tile whose f32 block stays within target_bytes (amortizes the
    ~0.35us per-step overhead) while never padding the image in HBM: either the full
    extent, a multiple of 128 dividing S exactly, or a 128-multiple tile with an
    in-kernel mask on the ragged last step."""
    ts_cap = max(128, target_bytes // (rows * 4))
    if s_total <= ts_cap:
        return s_total, False              # one step, full extent (exempt from 128 rule)
    if s_total % 128 == 0:
        base = s_total // 128
        best = 1
        for d in range(1, base + 1):
            if base % d == 0 and 128 * d <= ts_cap:
                best = d
        return 128 * best, False
    ts = max(128, (min(ts_cap, s_total) // 128) * 128)
    return ts, (s_total % ts) != 0


def _round_up(x, m):
    return ((x + m - 1) // m) * m


def _vmem_limit_bytes(rows, ts, tb, weights):
    """Explicit scoped-VMEM budget: double-buffered image block + double-buffered
    resident weights + output + scratch + headroom."""
    img = 2 * rows * ts * 4
    w = sum(2 * _round_up(a.shape[0], 8) * _round_up(a.shape[1], 128) * 4
            for a in weights)
    out = 2 * _round_up(tb, 8) * 128 * 4
    scr = _round_up(rows, 8) * 128 * 4
    return max(img + w + out + scr + (4 << 20), 16 << 20)


def _prepare_params(params, inv_s, tb, channels):
    """Offline (trace-time) weight fusion; all outputs are tiny."""
    wp, bp, wt, bt, wh, bh, w1a, w1b, b1, w2, b2 = params
    # Fuse the two matmuls that share the pooled LHS.
    wcat = jnp.concatenate([wp, wt], axis=1)                    # (C, NCAT)
    bcat = jnp.concatenate([bp, bt], axis=1)                    # (1, NCAT)
    # pooled @ Wcat is computed as sel @ (acc * wbig): no in-kernel reshape.
    wbig = jnp.tile(wcat, (tb, 1)) * jnp.float32(inv_s)         # (tb*C, NCAT), 1/S folded in
    r = jnp.arange(tb * channels)
    sel = (r[None, :] // channels
           == jnp.arange(tb)[:, None]).astype(jnp.float32)      # (tb, tb*C)
    # Fold dense2 into dense1 (Linear -> Linear, no nonlinearity between).
    wfa = w1a @ w2                                              # (128, 1)
    wfb = w1b @ w2                                              # (37, 1)
    bf  = b1 @ w2 + b2                                          # (1, 1)
    return sel, wbig, bcat, wh, bh, wfa, wfb, bf


def pawpular_forward(image, params, *, ts=None, target_block_bytes=6 << 20):
    """image: (B, C, H, W) float32, NCHW. Returns (B,) sigmoid scores."""
    B, C, H, W = image.shape
    S = H * W

    # Lane-dense layout: rows = B*C (sublanes), spatial on lanes.  No HBM padding.
    x2d = image.reshape(B * C, S).astype(jnp.float32)

    tb = _pick_batch_tile(B, C)
    n_b = B // tb
    rows = tb * C

    if ts is None:
        ts, ragged = _pick_spatial_tile(S, rows, target_block_bytes)
    else:
        ts = min(int(ts), S)
        if ts < S:
            ts = max(128, (ts // 128) * 128)
        ragged = (S % ts) != 0
    n_s = pl.cdiv(S, ts)

    weights = _prepare_params(params, 1.0 / S, tb, C)
    # Weights get constant index_maps -> DMA'd once, resident in VMEM for all steps.
    w_specs = [pl.BlockSpec(w.shape, lambda i, k: (0, 0)) for w in weights]

    kernel = _make_kernel(n_s, ts, S, ragged)

    out = pl.pallas_call(
        kernel,
        out_shape=jax.ShapeDtypeStruct((n_b, tb, 1), jnp.float32),
        grid_spec=pltpu.PrefetchScalarGridSpec(
            num_scalar_prefetch=0,
            grid=(n_b, n_s),                                   # (batch, spatial-reduction)
            in_specs=[pl.BlockSpec((rows, ts), lambda i, k: (i, k))] + w_specs,
            out_specs=pl.BlockSpec((1, tb, 1), lambda i, k: (i, 0, 0)),
            scratch_shapes=[pltpu.VMEM((rows, 1), jnp.float32)],
        ),
        compiler_params=pltpu.CompilerParams(
            dimension_semantics=("parallel", "arbitrary"),
            vmem_limit_bytes=int(_vmem_limit_bytes(rows, ts, tb, weights))),
    )(x2d, *weights)

    return out.reshape(B)


def pawpular_reference(image, params):
    """Pure-JAX reference with the original (unfused) parameters."""
    wp, bp, wt, bt, wh, bh, w1a, w1b, b1, w2, b2 = params
    B, C, H, W = image.shape
    pooled = jnp.mean(image.reshape(B, C, H * W).astype(jnp.float32), axis=-1)  # (B, C)
    p = jax.nn.softmax(pooled @ wp + bp, axis=1)                                # (B, 37)
    feat = jnp.tanh(pooled @ wt + bt)
    x128 = feat @ wh + bh                                                       # (B, 128)
    cat = jnp.concatenate([x128, p], axis=1)                                    # (B, 165)
    h = cat @ jnp.concatenate([w1a, w1b], axis=0) + b1                          # (B, 64)
    o = h @ w2 + b2                                                             # (B, 1)
    return jax.nn.sigmoid(o[:, 0])


if __name__ == "__main__":
    keys = jax.random.split(jax.random.PRNGKey(0), 3)

    def run_case(case_key, B, C, H, W, ts):
        k_img, k_par = jax.random.split(case_key)
        image = jax.random.normal(k_img, (B, C, H, W), jnp.float32)   # NCHW like PyTorch
        params = init_params(k_par, C)
        scores = jax.block_until_ready(pawpular_forward(image, params, ts=ts))
        ref = pawpular_reference(image, params)
        assert scores.shape == (B,)
        assert bool(jnp.all(jnp.isfinite(scores)))
        assert bool(jnp.allclose(scores, ref, atol=2e-3, rtol=2e-3)), (scores, ref)

    # 1) Forced ts=128: 2 spatial reduction steps, 2 batch tiles -> exercises the
    #    full (parallel, arbitrary) grid and the accumulator init/epilogue.
    run_case(keys[0], B=4, C=4, H=16, W=16, ts=128)
    # 2) Auto tile selection: ts grows to the full spatial extent (single step).
    run_case(keys[1], B=4, C=4, H=16, W=16, ts=None)
    # 3) Ragged spatial extent (S=225, not a multiple of 128): no HBM pad, the last
    #    tile is masked in-kernel.
    run_case(keys[2], B=2, C=4, H=15, W=15, ts=128)

    print("KERNEL_OK")
</pallas_src>

<mosaic_0001>
module attributes {stable_mosaic.version = 11 : i64} {
  func.func @kernel(%arg0: i32, %arg1: i32, %arg2: memref<8x128xf32, #tpu.memory_space<vmem>>, %arg3: memref<2x8xf32, #tpu.memory_space<vmem>>, %arg4: memref<8x69xf32, #tpu.memory_space<vmem>>, %arg5: memref<1x69xf32, #tpu.memory_space<vmem>>, %arg6: memref<32x128xf32, #tpu.memory_space<vmem>>, %arg7: memref<1x128xf32, #tpu.memory_space<vmem>>, %arg8: memref<128x1xf32, #tpu.memory_space<vmem>>, %arg9: memref<37x1xf32, #tpu.memory_space<vmem>>, %arg10: memref<1x1xf32, #tpu.memory_space<vmem>>, %arg11: memref<1x2x1xf32, #tpu.memory_space<vmem>>, %arg12: memref<8x1xf32, #tpu.memory_space<vmem>>) attributes {dimension_semantics = [#tpu.dimension_semantics<parallel>, #tpu.dimension_semantics<arbitrary>], iteration_bounds = array<i64: 2, 2>, scalar_prefetch = 0 : i64, scratch_operands = 1 : i64, tpu.core_type = #tpu.core_type<tc>, window_params = [{transform_indices = @transform_0, window_bounds = array<i64: 8, 128>}, {pipeline_mode = #tpu.pipeline_mode<synchronous>, transform_indices = @transform_1, window_bounds = array<i64: 2, 8>}, {pipeline_mode = #tpu.pipeline_mode<synchronous>, transform_indices = @transform_2, window_bounds = array<i64: 8, 69>}, {pipeline_mode = #tpu.pipeline_mode<synchronous>, transform_indices = @transform_3, window_bounds = array<i64: 1, 69>}, {pipeline_mode = #tpu.pipeline_mode<synchronous>, transform_indices = @transform_4, window_bounds = array<i64: 32, 128>}, {pipeline_mode = #tpu.pipeline_mode<synchronous>, transform_indices = @transform_5, window_bounds = array<i64: 1, 128>}, {pipeline_mode = #tpu.pipeline_mode<synchronous>, transform_indices = @transform_6, window_bounds = array<i64: 128, 1>}, {pipeline_mode = #tpu.pipeline_mode<synchronous>, transform_indices = @transform_7, window_bounds = array<i64: 37, 1>}, {pipeline_mode = #tpu.pipeline_mode<synchronous>, transform_indices = @transform_8, window_bounds = array<i64: 1, 1>}, {transform_indices = @transform_9, window_bounds = array<i64: 1, 2, 1>}]} {
    %c0_i32 = arith.constant 0 : i32
    %0 = arith.cmpi eq, %arg1, %c0_i32 : i32
    %1 = arith.extui %0 : i1 to i32
    %c0_i32_0 = arith.constant 0 : i32
    %2 = arith.cmpi ne, %1, %c0_i32_0 : i32
    scf.if %2 {
      %cst_7 = arith.constant 0.000000e+00 : f32
      %12 = vector.broadcast %cst_7 : f32 to vector<8x1xf32>
      %c0_8 = arith.constant 0 : index
      %c0_9 = arith.constant 0 : index
      %13 = vector.load %arg12[%c0_8, %c0_9] : memref<8x1xf32, #tpu.memory_space<vmem>>, vector<8x1xf32>
      tpu.vector_store %arg12[%c0_8, %c0_9], %12 {strides = array<i32>} : memref<8x1xf32, #tpu.memory_space<vmem>>, vector<8x1xf32>,
    } else {
    }
    %c0 = arith.constant 0 : index
    %c0_1 = arith.constant 0 : index
    %3 = vector.load %arg12[%c0, %c0_1] : memref<8x1xf32, #tpu.memory_space<vmem>>, vector<8x1xf32>
    %c0_2 = arith.constant 0 : index
    %c0_3 = arith.constant 0 : index
    %4 = vector.load %arg2[%c0_2, %c0_3] : memref<8x128xf32, #tpu.memory_space<vmem>>, vector<8x128xf32>
    %cst = arith.constant dense<0.000000e+00> : vector<8xf32>
    %5 = vector.multi_reduction <add>, %4, %cst [1] : vector<8x128xf32> to vector<8xf32>
    %6 = vector.shape_cast %5 : vector<8xf32> to vector<8x1xf32>
    %7 = arith.addf %3, %6 : vector<8x1xf32>
    %c0_4 = arith.constant 0 : index
    %c0_5 = arith.constant 0 : index
    %8 = vector.load %arg12[%c0_4, %c0_5] : memref<8x1xf32, #tpu.memory_space<vmem>>, vector<8x1xf32>
    tpu.vector_store %arg12[%c0_4, %c0_5], %7 {strides = array<i32>} : memref<8x1xf32, #tpu.memory_space<vmem>>, vector<8x1xf32>,
    %c1_i32 = arith.constant 1 : i32
    %9 = arith.cmpi eq, %arg1, %c1_i32 : i32
    %10 = arith.extui %9 : i1 to i32
    %c0_i32_6 = arith.constant 0 : i32
    %11 = arith.cmpi ne, %10, %c0_i32_6 : i32
    scf.if %11 {
      %c0_7 = arith.constant 0 : index
      %c0_8 = arith.constant 0 : index
      %12 = vector.load %arg12[%c0_7, %c0_8] : memref<8x1xf32, #tpu.memory_space<vmem>>, vector<8x1xf32>
      %c0_9 = arith.constant 0 : index
      %c0_10 = arith.constant 0 : index
      %13 = vector.load %arg4[%c0_9, %c0_10] : memref<8x69xf32, #tpu.memory_space<vmem>>, vector<8x69xf32>
      %14 = vector.broadcast %12 : vector<8x1xf32> to vector<8x69xf32>
      %15 = arith.mulf %14, %13 : vector<8x69xf32>
      %c0_11 = arith.constant 0 : index
      %c0_12 = arith.constant 0 : index
      %16 = vector.load %arg3[%c0_11, %c0_12] : memref<2x8xf32, #tpu.memory_space<vmem>>, vector<2x8xf32>
      %cst_13 = arith.constant dense<0.000000e+00> : vector<2x69xf32>
      %17 = tpu.matmul %16, %15, %cst_13 {dimension_numbers = #tpu.dot_dimension_numbers<[1], [0], [0], [1], [0, 0, 1, 1], [], []>} : vector<2x8xf32>, vector<8x69xf32>, vector<2x69xf32> -> vector<2x69xf32>
      %c0_14 = arith.constant 0 : index
      %c0_15 = arith.constant 0 : index
      %18 = vector.load %arg5[%c0_14, %c0_15] : memref<1x69xf32, #tpu.memory_space<vmem>>, vector<1x69xf32>
      %19 = vector.broadcast %18 : vector<1x69xf32> to vector<2x69xf32>
      %20 = arith.addf %17, %19 : vector<2x69xf32>
      %21 = vector.extract_strided_slice %20 {offsets = [0, 0], sizes = [2, 37], strides = [1, 1]} : vector<2x69xf32> to vector<2x37xf32>
      %cst_16 = arith.constant dense<0xFF800000> : vector<2xf32>
      %22 = vector.multi_reduction <maximumf>, %21, %cst_16 [1] : vector<2x37xf32> to vector<2xf32>
      %23 = vector.shape_cast %22 : vector<2xf32> to vector<2x1xf32>
      %24 = vector.broadcast %23 : vector<2x1xf32> to vector<2x37xf32>
      %25 = arith.subf %21, %24 : vector<2x37xf32>
      %26 = math.exp %25 : vector<2x37xf32>
      %cst_17 = arith.constant dense<0.000000e+00> : vector<2xf32>
      %27 = vector.multi_reduction <add>, %26, %cst_17 [1] : vector<2x37xf32> to vector<2xf32>
      %28 = vector.shape_cast %27 : vector<2xf32> to vector<2x1xf32>
      %29 = vector.broadcast %28 : vector<2x1xf32> to vector<2x37xf32>
      %30 = arith.divf %26, %29 : vector<2x37xf32>
      %31 = vector.extract_strided_slice %20 {offsets = [0, 37], sizes = [2, 32], strides = [1, 1]} : vector<2x69xf32> to vector<2x32xf32>
      %32 = math.tanh %31 : vector<2x32xf32>
      %c0_18 = arith.constant 0 : index
      %c0_19 = arith.constant 0 : index
      %33 = vector.load %arg6[%c0_18, %c0_19] : memref<32x128xf32, #tpu.memory_space<vmem>>, vector<32x128xf32>
      %cst_20 = arith.constant dense<0.000000e+00> : vector<2x128xf32>
      %34 = tpu.matmul %32, %33, %cst_20 {dimension_numbers = #tpu.dot_dimension_numbers<[1], [0], [0], [1], [0, 0, 1, 1], [], []>} : vector<2x32xf32>, vector<32x128xf32>, vector<2x128xf32> -> vector<2x128xf32>
      %c0_21 = arith.constant 0 : index
      %c0_22 = arith.constant 0 : index
      %35 = vector.load %arg7[%c0_21, %c0_22] : memref<1x128xf32, #tpu.memory_space<vmem>>, vector<1x128xf32>
      %36 = vector.broadcast %35 : vector<1x128xf32> to vector<2x128xf32>
      %37 = arith.addf %34, %36 : vector<2x128xf32>
      %c0_23 = arith.constant 0 : index
      %c0_24 = arith.constant 0 : index
      %38 = vector.load %arg8[%c0_23, %c0_24] : memref<128x1xf32, #tpu.memory_space<vmem>>, vector<128x1xf32>
      %cst_25 = arith.constant dense<0.000000e+00> : vector<2x1xf32>
      %39 = tpu.matmul %37, %38, %cst_25 {dimension_numbers = #tpu.dot_dimension_numbers<[1], [0], [0], [1], [0, 0, 1, 1], [], []>} : vector<2x128xf32>, vector<128x1xf32>, vector<2x1xf32> -> vector<2x1xf32>
      %c0_26 = arith.constant 0 : index
      %c0_27 = arith.constant 0 : index
      %40 = vector.load %arg9[%c0_26, %c0_27] : memref<37x1xf32, #tpu.memory_space<vmem>>, vector<37x1xf32>
      %cst_28 = arith.constant dense<0.000000e+00> : vector<2x1xf32>
      %41 = tpu.matmul %30, %40, %cst_28 {dimension_numbers = #tpu.dot_dimension_numbers<[1], [0], [0], [1], [0, 0, 1, 1], [], []>} : vector<2x37xf32>, vector<37x1xf32>, vector<2x1xf32> -> vector<2x1xf32>
      %42 = arith.addf %39, %41 : vector<2x1xf32>
      %c0_29 = arith.constant 0 : index
      %c0_30 = arith.constant 0 : index
      %43 = vector.load %arg10[%c0_29, %c0_30] : memref<1x1xf32, #tpu.memory_space<vmem>>, vector<1x1xf32>
      %44 = vector.broadcast %43 : vector<1x1xf32> to vector<2x1xf32>
      %45 = arith.addf %42, %44 : vector<2x1xf32>
      %46 = arith.negf %45 : vector<2x1xf32>
      %47 = math.exp %46 : vector<2x1xf32>
      %cst_31 = arith.constant 1.000000e+00 : f32
      %48 = vector.broadcast %cst_31 : f32 to vector<2x1xf32>
      %49 = arith.addf %48, %47 : vector<2x1xf32>
      %50 = arith.divf %48, %49 : vector<2x1xf32>
      %c0_32 = arith.constant 0 : index
      %c0_33 = arith.constant 0 : index
      %c0_34 = arith.constant 0 : index
      %51 = vector.load %arg11[%c0_32, %c0_33, %c0_34] : memref<1x2x1xf32, #tpu.memory_space<vmem>>, vector<1x2x1xf32>
      %52 = vector.shape_cast %51 : vector<1x2x1xf32> to vector<2x1xf32>
      %53 = vector.shape_cast %50 : vector<2x1xf32> to vector<1x2x1xf32>
      tpu.vector_store %arg11[%c0_32, %c0_33, %c0_34], %53 {strides = array<i32>} : memref<1x2x1xf32, #tpu.memory_space<vmem>>, vector<1x2x1xf32>,
    } else {
    }
    return
  }
  func.func @transform_0(%arg0: i32, %arg1: i32) -> (i32, i32) {
    %c0_i32 = arith.constant 0 : i32
    return %arg0, %arg1 : i32, i32
  }
  func.func @transform_1(%arg0: i32, %arg1: i32) -> (i32, i32) {
    %c0_i32 = arith.constant 0 : i32
    %c0_i32_0 = arith.constant 0 : i32
    %c0_i32_1 = arith.constant 0 : i32
    return %c0_i32, %c0_i32_0 : i32, i32
  }
  func.func @transform_2(%arg0: i32, %arg1: i32) -> (i32, i32) {
    %c0_i32 = arith.constant 0 : i32
    %c0_i32_0 = arith.constant 0 : i32
    %c0_i32_1 = arith.constant 0 : i32
    return %c0_i32, %c0_i32_0 : i32, i32
  }
  func.func @transform_3(%arg0: i32, %arg1: i32) -> (i32, i32) {
    %c0_i32 = arith.constant 0 : i32
    %c0_i32_0 = arith.constant 0 : i32
    %c0_i32_1 = arith.constant 0 : i32
    return %c0_i32, %c0_i32_0 : i32, i32
  }
  func.func @transform_4(%arg0: i32, %arg1: i32) -> (i32, i32) {
    %c0_i32 = arith.constant 0 : i32
    %c0_i32_0 = arith.constant 0 : i32
    %c0_i32_1 = arith.constant 0 : i32
    return %c0_i32, %c0_i32_0 : i32, i32
  }
  func.func @transform_5(%arg0: i32, %arg1: i32) -> (i32, i32) {
    %c0_i32 = arith.constant 0 : i32
    %c0_i32_0 = arith.constant 0 : i32
    %c0_i32_1 = arith.constant 0 : i32
    return %c0_i32, %c0_i32_0 : i32, i32
  }
  func.func @transform_6(%arg0: i32, %arg1: i32) -> (i32, i32) {
    %c0_i32 = arith.constant 0 : i32
    %c0_i32_0 = arith.constant 0 : i32
    %c0_i32_1 = arith.constant 0 : i32
    return %c0_i32, %c0_i32_0 : i32, i32
  }
  func.func @transform_7(%arg0: i32, %arg1: i32) -> (i32, i32) {
    %c0_i32 = arith.constant 0 : i32
    %c0_i32_0 = arith.constant 0 : i32
    %c0_i32_1 = arith.constant 0 : i32
    return %c0_i32, %c0_i32_0 : i32, i32
  }
  func.func @transform_8(%arg0: i32, %arg1: i32) -> (i32, i32) {
    %c0_i32 = arith.constant 0 : i32
    %c0_i32_0 = arith.constant 0 : i32
    %c0_i32_1 = arith.constant 0 : i32
    return %c0_i32, %c0_i32_0 : i32, i32
  }
  func.func @transform_9(%arg0: i32, %arg1: i32) -> (i32, i32, i32) {
    %c0_i32 = arith.constant 0 : i32
    %c0_i32_0 = arith.constant 0 : i32
    %c0_i32_1 = arith.constant 0 : i32
    return %arg0, %c0_i32, %c0_i32_0 : i32, i32, i32
  }
}

</mosaic_0001>

<llo_original>
// kernel: tpu_custom_call.1
$region0: #{tpu_custom_call.1}
  #allocation0 [shape = 'u32[]', space=smem, size = 0x4, offset = 0x4, fixed_abs, tag = 'smem constant byte address 0x4 - core index']
  #allocation1 [shape = 'u32[72,128]{1,0:T(1,128)}', space=vmem, size = 0x9000, scoped, tag = 'internal scratch']
  #allocation2 [shape = 'f32[8,1]{1,0:T(8,128)}', space=vmem, size = 0x1000, scoped, tag = 'scratch operand']
  #allocation3 [shape = 'f32[1,1]{1,0:T(1,128)S(1)}', space=vmem, size = 0x200, scoped, tag = 'scoped memory for tpu_custom_call.1']
  %s0 = inlined_call_operand.vmem [shape: f32[16,256], index: 0, kind: input, shape index: {}]
  %s1 = inlined_call_operand.vmem [shape: f32[2,8], index: 1, kind: input, shape index: {}]
  %s2 = inlined_call_operand.vmem [shape: f32[8,69], index: 2, kind: input, shape index: {}]
  %s3 = inlined_call_operand.vmem [shape: f32[1,69], index: 3, kind: input, shape index: {}]
  %s4 = inlined_call_operand.vmem [shape: f32[32,128], index: 4, kind: input, shape index: {}]
  %s5 = inlined_call_operand.vmem [shape: f32[1,128], index: 5, kind: input, shape index: {}]
  %s6 = inlined_call_operand.vmem [shape: f32[128,1], index: 6, kind: input, shape index: {}]
  %s7 = inlined_call_operand.vmem [shape: f32[37,1], index: 7, kind: input, shape index: {}]
  %s8 = inlined_call_operand.<no memory space> [shape: f32[1,1], index: 8, kind: input, shape index: {}]
  %s9 = inlined_call_operand.vmem [shape: f32[2,2,1], index: 9, kind: output, shape index: {}]
  %s10 = sld [smem:[#allocation0]]
  $region77: #{tpu_custom_call.1} parent=0
    _
  %s12 = ssub.s32 1, %s10
  %s13 = scalar_select 0, %s12, %s10
  %v14 = vstv %s8
  %15 = vst [vmem:[#allocation3] sm:$0x1] %v14
  loop: start=0, step=1, limit=6
  $region2: #{tpu_custom_call.1} parent=0 // loop_pre_header
    _
  $region3: #{tpu_custom_call.1} parent=0 // loop_header
    %s17 = sphi 0, %s21
    %p18 = scmp.ge.s32.totalorder %s17, 6
    %s24 = sphi 0, %s36
    %s25 = sphi 0, %s32
    %s26 = sphi 0, %s24
    %s27 = sphi 0, %s25
    %s28 = sphi 0, %s26
    %s29 = sphi 0, %s27
    %s41 = sphi 0, %s43
    %s44 = sphi 0, %s41
    %s45 = sphi 0, %s44
    %s61 = sphi 0, %s45
    %s65 = sphi 0, %s65
    %s67 = sphi 0, %s65
    %s68 = sphi 0, %s67
    %s82 = sphi 0, %s68
    %s86 = sphi 0, %s86
    %s88 = sphi 0, %s86
    %s89 = sphi 0, %s88
    %s103 = sphi 0, %s89
    %s107 = sphi 0, %s107
    %s109 = sphi 0, %s107
    %s110 = sphi 0, %s109
    %s124 = sphi 0, %s110
    %s128 = sphi 0, %s128
    %s130 = sphi 0, %s128
    %s131 = sphi 0, %s130
    %s145 = sphi 0, %s131
    %s149 = sphi 0, %s149
    %s151 = sphi 0, %s149
    %s152 = sphi 0, %s151
    %s166 = sphi 0, %s152
    %s170 = sphi 0, %s170
    %s172 = sphi 0, %s170
    %s173 = sphi 0, %s172
    %s187 = sphi 0, %s173
    %s191 = sphi 0, %s191
    %s193 = sphi 0, %s191
    %s194 = sphi 0, %s193
    %s208 = sphi 0, %s194
    %s212 = sphi 0, %s212
    %s214 = sphi 0, %s212
    %s215 = sphi 0, %s214
    %s229 = sphi 0, %s215
    %s235 = sphi 0, %s237
    %s238 = sphi 0, %s235
    %s239 = sphi 0, %s238
    %s255 = sphi 0, %s239
  $region4: #{tpu_custom_call.1} parent=0 // loop_header_branch
    %20 = sbr.rel (%p18) target = $region8
  $region5: #{tpu_custom_call.1} parent=0 // loop_body
    %s22 = ssub.s32 %s17, 1
    %s23 = ssub.s32 %s17, 2
    %s30 = sadd.s32 1, %s25
    %p31 = scmp.ge.s32.totalorder %s30, 2
    %s32 = scalar_select %p31, 0, %s30
    %s33 = sadd.s32 1, %s24
    %s34 = scalar_select %p31, %s33, %s24
    %p35 = scmp.ge.s32.totalorder %s34, 2
    %s36 = scalar_select %p35, 0, %s34
    %s37 = ssub.s32 %s24, %s36
    %s38 = ssub.s32 %s25, %s32
    %s39 = sor.u32 %s37, %s38
    %p40 = scmp.eq.s32.totalorder %s39, 0
    %s42 = sadd.s32 %s41, 1
    %s43 = scalar_select %p40, %s41, %s42
    %p46 = pneg %p40
    %p47 = scmp.eq.s32.totalorder %s17, 3
    %p48 = por %p46, %p47
    %p49 = scmp.ne.s32.totalorder %s41, %s44
    %p50 = scmp.eq.s32.totalorder %s17, 0
    %p51 = por %p49, %p50
    %p52 = scmp.ne.s32.totalorder %s41, %s44
    %p53 = scmp.eq.s32.totalorder %s22, 3
    %p54 = por %p52, %p53
    %p55 = scmp.ne.s32.totalorder %s44, %s45
    %p56 = scmp.eq.s32.totalorder %s22, 0
    %p57 = por %p55, %p56
    %p58 = scmp.ne.s32.totalorder %s44, %s45
    %p59 = scmp.eq.s32.totalorder %s23, 3
    %p60 = por %p58, %p59
    %p62 = scmp.ne.s32.totalorder %s45, %s61
    %p63 = scmp.eq.s32.totalorder %s23, 0
    %p64 = por %p62, %p63
    %s66 = sadd.s32 %s65, 1
    %p69 = scmp.eq.s32.totalorder %s17, 3
    %p70 = scmp.ne.s32.totalorder %s65, %s67
    %p71 = scmp.eq.s32.totalorder %s17, 0
    %p72 = por %p70, %p71
    %p73 = scmp.ne.s32.totalorder %s65, %s67
    %p74 = scmp.eq.s32.totalorder %s22, 3
    %p75 = por %p73, %p74
    %p76 = scmp.ne.s32.totalorder %s67, %s68
    %p77 = scmp.eq.s32.totalorder %s22, 0
    %p78 = por %p76, %p77
    %p79 = scmp.ne.s32.totalorder %s67, %s68
    %p80 = scmp.eq.s32.totalorder %s23, 3
    %p81 = por %p79, %p80
    %p83 = scmp.ne.s32.totalorder %s68, %s82
    %p84 = scmp.eq.s32.totalorder %s23, 0
    %p85 = por %p83, %p84
    %s87 = sadd.s32 %s86, 1
    %p90 = scmp.eq.s32.totalorder %s17, 3
    %p91 = scmp.ne.s32.totalorder %s86, %s88
    %p92 = scmp.eq.s32.totalorder %s17, 0
    %p93 = por %p91, %p92
    %p94 = scmp.ne.s32.totalorder %s86, %s88
    %p95 = scmp.eq.s32.totalorder %s22, 3
    %p96 = por %p94, %p95
    %p97 = scmp.ne.s32.totalorder %s88, %s89
    %p98 = scmp.eq.s32.totalorder %s22, 0
    %p99 = por %p97, %p98
    %p100 = scmp.ne.s32.totalorder %s88, %s89
    %p101 = scmp.eq.s32.totalorder %s23, 3
    %p102 = por %p100, %p101
    %p104 = scmp.ne.s32.totalorder %s89, %s103
    %p105 = scmp.eq.s32.totalorder %s23, 0
    %p106 = por %p104, %p105
    %s108 = sadd.s32 %s107, 1
    %p111 = scmp.eq.s32.totalorder %s17, 3
    %p112 = scmp.ne.s32.totalorder %s107, %s109
    %p113 = scmp.eq.s32.totalorder %s17, 0
    %p114 = por %p112, %p113
    %p115 = scmp.ne.s32.totalorder %s107, %s109
    %p116 = scmp.eq.s32.totalorder %s22, 3
    %p117 = por %p115, %p116
    %p118 = scmp.ne.s32.totalorder %s109, %s110
    %p119 = scmp.eq.s32.totalorder %s22, 0
    %p120 = por %p118, %p119
    %p121 = scmp.ne.s32.totalorder %s109, %s110
    %p122 = scmp.eq.s32.totalorder %s23, 3
    %p123 = por %p121, %p122
    %p125 = scmp.ne.s32.totalorder %s110, %s124
    %p126 = scmp.eq.s32.totalorder %s23, 0
    %p127 = por %p125, %p126
    %s129 = sadd.s32 %s128, 1
    %p132 = scmp.eq.s32.totalorder %s17, 3
    %p133 = scmp.ne.s32.totalorder %s128, %s130
    %p134 = scmp.eq.s32.totalorder %s17, 0
    %p135 = por %p133, %p134
    %p136 = scmp.ne.s32.totalorder %s128, %s130
    %p137 = scmp.eq.s32.totalorder %s22, 3
    %p138 = por %p136, %p137
    %p139 = scmp.ne.s32.totalorder %s130, %s131
    %p140 = scmp.eq.s32.totalorder %s22, 0
    %p141 = por %p139, %p140
    %p142 = scmp.ne.s32.totalorder %s130, %s131
    %p143 = scmp.eq.s32.totalorder %s23, 3
    %p144 = por %p142, %p143
    %p146 = scmp.ne.s32.totalorder %s131, %s145
    %p147 = scmp.eq.s32.totalorder %s23, 0
    %p148 = por %p146, %p147
    %s150 = sadd.s32 %s149, 1
    %p153 = scmp.eq.s32.totalorder %s17, 3
    %p154 = scmp.ne.s32.totalorder %s149, %s151
    %p155 = scmp.eq.s32.totalorder %s17, 0
    %p156 = por %p154, %p155
    %p157 = scmp.ne.s32.totalorder %s149, %s151
    %p158 = scmp.eq.s32.totalorder %s22, 3
    %p159 = por %p157, %p158
    %p160 = scmp.ne.s32.totalorder %s151, %s152
    %p161 = scmp.eq.s32.totalorder %s22, 0
    %p162 = por %p160, %p161
    %p163 = scmp.ne.s32.totalorder %s151, %s152
    %p164 = scmp.eq.s32.totalorder %s23, 3
    %p165 = por %p163, %p164
    %p167 = scmp.ne.s32.totalorder %s152, %s166
    %p168 = scmp.eq.s32.totalorder %s23, 0
    %p169 = por %p167, %p168
    %s171 = sadd.s32 %s170, 1
    %p174 = scmp.eq.s32.totalorder %s17, 3
    %p175 = scmp.ne.s32.totalorder %s170, %s172
    %p176 = scmp.eq.s32.totalorder %s17, 0
    %p177 = por %p175, %p176
    %p178 = scmp.ne.s32.totalorder %s170, %s172
    %p179 = scmp.eq.s32.totalorder %s22, 3
    %p180 = por %p178, %p179
    %p181 = scmp.ne.s32.totalorder %s172, %s173
    %p182 = scmp.eq.s32.totalorder %s22, 0
    %p183 = por %p181, %p182
    %p184 = scmp.ne.s32.totalorder %s172, %s173
    %p185 = scmp.eq.s32.totalorder %s23, 3
    %p186 = por %p184, %p185
    %p188 = scmp.ne.s32.totalorder %s173, %s187
    %p189 = scmp.eq.s32.totalorder %s23, 0
    %p190 = por %p188, %p189
    %s192 = sadd.s32 %s191, 1
    %p195 = scmp.eq.s32.totalorder %s17, 3
    %p196 = scmp.ne.s32.totalorder %s191, %s193
    %p197 = scmp.eq.s32.totalorder %s17, 0
    %p198 = por %p196, %p197
    %p199 = scmp.ne.s32.totalorder %s191, %s193
    %p200 = scmp.eq.s32.totalorder %s22, 3
    %p201 = por %p199, %p200
    %p202 = scmp.ne.s32.totalorder %s193, %s194
    %p203 = scmp.eq.s32.totalorder %s22, 0
    %p204 = por %p202, %p203
    %p205 = scmp.ne.s32.totalorder %s193, %s194
    %p206 = scmp.eq.s32.totalorder %s23, 3
    %p207 = por %p205, %p206
    %p209 = scmp.ne.s32.totalorder %s194, %s208
    %p210 = scmp.eq.s32.totalorder %s23, 0
    %p211 = por %p209, %p210
    %s213 = sadd.s32 %s212, 1
    %p216 = scmp.eq.s32.totalorder %s17, 3
    %p217 = scmp.ne.s32.totalorder %s212, %s214
    %p218 = scmp.eq.s32.totalorder %s17, 0
    %p219 = por %p217, %p218
    %p220 = scmp.ne.s32.totalorder %s212, %s214
    %p221 = scmp.eq.s32.totalorder %s22, 3
    %p222 = por %p220, %p221
    %p223 = scmp.ne.s32.totalorder %s214, %s215
    %p224 = scmp.eq.s32.totalorder %s22, 0
    %p225 = por %p223, %p224
    %p226 = scmp.ne.s32.totalorder %s214, %s215
    %p227 = scmp.eq.s32.totalorder %s23, 3
    %p228 = por %p226, %p227
    %p230 = scmp.ne.s32.totalorder %s215, %s229
    %p231 = scmp.eq.s32.totalorder %s23, 0
    %p232 = por %p230, %p231
    %s233 = ssub.s32 %s24, %s36
    %p234 = scmp.eq.s32.totalorder %s233, 0
    %s236 = sadd.s32 %s235, 1
    %s237 = scalar_select %p234, %s235, %s236
    %p240 = pneg %p234
    %p241 = scmp.eq.s32.totalorder %s17, 3
    %p242 = por %p240, %p241
    %p243 = scmp.ne.s32.totalorder %s235, %s238
    %p244 = scmp.eq.s32.totalorder %s17, 0
    %p245 = por %p243, %p244
    %p246 = scmp.ne.s32.totalorder %s235, %s238
    %p247 = scmp.eq.s32.totalorder %s22, 3
    %p248 = por %p246, %p247
    %p249 = scmp.ne.s32.totalorder %s238, %s239
    %p250 = scmp.eq.s32.totalorder %s22, 0
    %p251 = por %p249, %p250
    %p252 = scmp.ne.s32.totalorder %s238, %s239
    %p253 = scmp.eq.s32.totalorder %s23, 3
    %p254 = por %p252, %p253
    %p256 = scmp.ne.s32.totalorder %s239, %s255
    %p257 = scmp.eq.s32.totalorder %s23, 0
    %p258 = por %p256, %p257
    %p259 = scmp.le.s32.totalorder 1, %s17
    %p260 = scmp.lt.s32.totalorder %s17, 5
    %p261 = pnand %p259, %p260
    %p262 = pneg %p261
    // Predicated region
    $region9: #{tpu_custom_call.1} parent=5 // pred_check
      _
    $region10: #{tpu_custom_call.1} parent=5 // pred_check_branch
      %264 = sbr.rel (%p261) target = $region12
    $region11: #{tpu_custom_call.1} parent=5 // pred_region
      %s265 = ssub.s32 %s17, 1
      // Predicated region
      $region13: #{tpu_custom_call.1} parent=11 // pred_check
        %p266 = pneg %p78
      $region14: #{tpu_custom_call.1} parent=11 // pred_check_branch
        %268 = sbr.rel (%p266) target = $region16
      $region15: #{tpu_custom_call.1} parent=11 // pred_region
        _
      $region16: #{tpu_custom_call.1} parent=11 // pred_fallthru
        _
      // Predicated region
      $region17: #{tpu_custom_call.1} parent=11 // pred_check
        %p269 = pneg %p99
      $region18: #{tpu_custom_call.1} parent=11 // pred_check_branch
        %271 = sbr.rel (%p269) target = $region20
      $region19: #{tpu_custom_call.1} parent=11 // pred_region
        _
      $region20: #{tpu_custom_call.1} parent=11 // pred_fallthru
        _
      // Predicated region
      $region21: #{tpu_custom_call.1} parent=11 // pred_check
        %p272 = pneg %p120
      $region22: #{tpu_custom_call.1} parent=11 // pred_check_branch
        %274 = sbr.rel (%p272) target = $region24
      $region23: #{tpu_custom_call.1} parent=11 // pred_region
        _
      $region24: #{tpu_custom_call.1} parent=11 // pred_fallthru
        _
      // Predicated region
      $region25: #{tpu_custom_call.1} parent=11 // pred_check
        %p275 = pneg %p141
      $region26: #{tpu_custom_call.1} parent=11 // pred_check_branch
        %277 = sbr.rel (%p275) target = $region28
      $region27: #{tpu_custom_call.1} parent=11 // pred_region
        _
      $region28: #{tpu_custom_call.1} parent=11 // pred_fallthru
        _
      // Predicated region
      $region29: #{tpu_custom_call.1} parent=11 // pred_check
        %p278 = pneg %p162
      $region30: #{tpu_custom_call.1} parent=11 // pred_check_branch
        %280 = sbr.rel (%p278) target = $region32
      $region31: #{tpu_custom_call.1} parent=11 // pred_region
        _
      $region32: #{tpu_custom_call.1} parent=11 // pred_fallthru
        _
      // Predicated region
      $region33: #{tpu_custom_call.1} parent=11 // pred_check
        %p281 = pneg %p183
      $region34: #{tpu_custom_call.1} parent=11 // pred_check_branch
        %283 = sbr.rel (%p281) target = $region36
      $region35: #{tpu_custom_call.1} parent=11 // pred_region
        _
      $region36: #{tpu_custom_call.1} parent=11 // pred_fallthru
        _
      // Predicated region
      $region37: #{tpu_custom_call.1} parent=11 // pred_check
        %p284 = pneg %p204
      $region38: #{tpu_custom_call.1} parent=11 // pred_check_branch
        %286 = sbr.rel (%p284) target = $region40
      $region39: #{tpu_custom_call.1} parent=11 // pred_region
        _
      $region40: #{tpu_custom_call.1} parent=11 // pred_fallthru
        _
      // Predicated region
      $region41: #{tpu_custom_call.1} parent=11 // pred_check
        %p287 = pneg %p225
      $region42: #{tpu_custom_call.1} parent=11 // pred_check_branch
        %289 = sbr.rel (%p287) target = $region44
      $region43: #{tpu_custom_call.1} parent=11 // pred_region
        _
      $region44: #{tpu_custom_call.1} parent=11 // pred_fallthru
        _
    $region12: #{tpu_custom_call.1} parent=5 // pred_fallthru
      _
    %p290 = scmp.lt.s32.totalorder %s17, 4
    // Predicated region
    $region45: #{tpu_custom_call.1} parent=5 // pred_check
      %p291 = pneg %p290
    $region46: #{tpu_custom_call.1} parent=5 // pred_check_branch
      %293 = sbr.rel (%p291) target = $region48
    $region47: #{tpu_custom_call.1} parent=5 // pred_region
      // Predicated region
      $region49: #{tpu_custom_call.1} parent=47 // pred_check
        %p294 = pneg %p51
      $region50: #{tpu_custom_call.1} parent=47 // pred_check_branch
        %296 = sbr.rel (%p294) target = $region52
      $region51: #{tpu_custom_call.1} parent=47 // pred_region
        %p297 = scmp.lt.s32.totalorder %s24, 1
        %s298 = scalar_select %p297, %s24, 1
        %p299 = scmp.lt.s32.totalorder %s25, 1
        %s300 = scalar_select %p299, %s25, 1
        %s301 = smul.addr %s298, 2
        %s302 = sadd.s32 %s300, %s301
        %s303 = smul.addr %s302, 8
        %s304 = scalar_lea.vmem %s0, %s303
      $region52: #{tpu_custom_call.1} parent=47 // pred_fallthru
        _
    $region48: #{tpu_custom_call.1} parent=5 // pred_fallthru
      _
    %p305 = scmp.le.s32.totalorder 1, %s17
    %p306 = scmp.lt.s32.totalorder %s17, 5
    %p307 = pnand %p305, %p306
    %p308 = pneg %p307
    // Predicated region
    $region53: #{tpu_custom_call.1} parent=5 // pred_check
      _
    $region54: #{tpu_custom_call.1} parent=5 // pred_check_branch
      %310 = sbr.rel (%p307) target = $region56
    $region55: #{tpu_custom_call.1} parent=5 // pred_region
      %s311 = ssub.s32 %s17, 1
      %p312 = scmp.lt.s32.totalorder %s26, 1
      %s313 = scalar_select %p312, %s26, 1
      %p314 = scmp.lt.s32.totalorder %s27, 1
      %s315 = scalar_select %p314, %s27, 1
      %s316 = smul.addr %s313, 2
      %s317 = sadd.s32 %s315, %s316
      %s318 = smul.addr %s317, 8
      %s319 = scalar_lea.vmem %s0, %s318
      %p320 = pneg %p57
      %p321 = pneg %p54
      %p322 = pneg %p78
      %p323 = pneg %p75
      %p324 = pneg %p99
      %p325 = pneg %p96
      %p326 = pneg %p120
      %p327 = pneg %p117
      %p328 = pneg %p141
      %p329 = pneg %p138
      %p330 = pneg %p162
      %p331 = pneg %p159
      %p332 = pneg %p183
      %p333 = pneg %p180
      %p334 = pneg %p204
      %p335 = pneg %p201
      %p336 = pneg %p225
      %p337 = pneg %p222
      %p338 = pneg %p251
      %p339 = pneg %p248
      %p340 = scmp.lt.s32.totalorder %s26, 1
      %s341 = scalar_select %p340, %s26, 1
      %s342 = smul.addr %s341, 2
      %s343 = scalar_lea.vmem %s9, %s342
      %p344 = scmp.lt.s32.totalorder %s26, 1
      %s345 = scalar_select %p344, %s26, 1
      %p346 = scmp.lt.s32.totalorder %s27, 1
      %s347 = scalar_select %p346, %s27, 1
      %s348 = smul.addr %s345, 2
      %s349 = sadd.s32 %s347, %s348
      %s350 = smul.addr %s349, 8
      %s351 = scalar_lea.vmem %s0, %s350
      %p352 = scmp.lt.s32.totalorder %s26, 1
      %s353 = scalar_select %p352, %s26, 1
      %s354 = smul.addr %s353, 2
      %s355 = scalar_lea.vmem %s9, %s354
      %p356 = scmp.eq.s32.totalorder %s27, 0
      // Predicated region
      $region57: #{tpu_custom_call.1} parent=55 // pred_check
        %p357 = pneg %p356
      $region58: #{tpu_custom_call.1} parent=55 // pred_check_branch
        %359 = sbr.rel (%p357) target = $region60
      $region59: #{tpu_custom_call.1} parent=55 // pred_region
        %vm360 = vcmask 7168
        %361 = vst.msk [vmem:[#allocation2] sm:$0xff] %vm360, 0.0
      $region60: #{tpu_custom_call.1} parent=55 // pred_fallthru
        _
      %v362 = vld [vmem:[#allocation2] sm:$0xff]
      %v363 = vld [vmem:[%s351] sm:$0xff]
      %364 = vadd.xlane.f32.xlu0 %v363
      %v365 = vpop.xlane.xlu0 %364
      %v366 = vadd.f32 %v362, %v365
      %vm367 = vcmask 7168
      %368 = vst.msk [vmem:[#allocation2] sm:$0xff] %vm367, %v366
      %p369 = scmp.eq.s32.totalorder %s27, 1
      // Predicated region
      $region61: #{tpu_custom_call.1} parent=55 // pred_check
        %p370 = pneg %p369
      $region62: #{tpu_custom_call.1} parent=55 // pred_check_branch
        %372 = sbr.rel (%p370) target = $region64
      $region63: #{tpu_custom_call.1} parent=55 // pred_region
        %v373 = vld [vmem:[#allocation2] sm:$0xff]
        %v374 = vld [vmem:[%s2] sm:$0xff]
        %376 = vset.pattern.permute.xlu0 0
        %377 = vperm.xlu0 %376, %v373
        %v378 = vpop.permute.xlu0 %377
        %v380 = vmul.f32 %v378, %v374
        %v381 = vld [vmem:[%s1] sm:$0x3]
        %v382 = vld [vmem:[%s3] sm:$0x1]
        %v384 = vperm.slane %v382, 0
        %vm386 = vcmask 64512
        %v388 = vsel %vm386, %v381, 0
        %390 = vmatpush.msra.mxu0 0.0
        %391 = vmatpush.msra.mxu0 0.0
        %392 = vmatpush.msra.mxu0 0.0
        %393 = vmatpush.msra.mxu0 0.0
        %394 = vmatpush.msra.mxu0 0.0
        %395 = vmatpush.msra.mxu0 0.0
        %396 = vmatpush.msra.mxu0 0.0
        %397 = vmatpush.msra.mxu0 0.0
        %398 = vmatpush.msra.mxu0 0.0
        %399 = vmatpush.msra.mxu0 0.0
        %400 = vmatpush.msra.mxu0 0.0
        %401 = vmatpush.msra.mxu0 0.0
        %402 = vmatpush.msra.mxu0 0.0
        %403 = vmatpush.msra.mxu0 0.0
        %404 = vmatpush.msra.mxu0 0.0
        %405 = vmatpush.msra.mxu0 %v380
        %406 = vmatmul.f32.gmra.mxu0 %v388
        %v407 = vpop.f32.mrf.mxu0
        %v408 = vadd.f32 %v384, %v407
        %409 = vdwg.mxu0
        %vm410 = vcmask 295936
        %v411 = vsel %vm410, %v408, -inf
        %412 = vmax.xlane.f32.xlu0 %v411
        %v413 = vpop.xlane.xlu0 %412
        %v414 = vsub.f32 %v408, %v413
        %v415 = vmul.f32 %v414, 1.442695
        %v416 = vpow.pop %v415
        %v417 = vsel %vm410, %v416, 0.0
        %418 = vadd.xlane.f32.xlu0 %v417
        %v419 = vpop.xlane.xlu0 %418
        %v420 = vrcp.pop %v419
        %v421 = vmul.f32 %v419, %v420
        %v422 = vsub.f32 1.0, %v421
        %v423 = vmul.f32 %v420, %v422
        %v424 = vadd.f32 %v420, %v423
        %vm425 = vweird.f32 %v419
        %vm426 = vweird.f32 %v420
        %vm427 = vmor %vm425, %vm426
        %v428 = vsel %vm427, %v420, %v424
        %v429 = vand.u32 2147483647, %v419
        %vm430 = vcmp.eq.f32.partialorder %v429, 8.507059e+37
        %v431 = vand.u32 %v419, 2147483648
        %v432 = vor.u32 1.1754944e-38, %v431
        %v433 = vsel %vm430, %v432, %v428
        %v434 = vmul.f32 %v416, %v433
        %v435 = vtanh.pop %v408
        %v436 = vld [vmem:[%s4] sm:$0xff]
        %v437 = vld [vmem:[%s4 + $0x8] sm:$0xff]
        %v438 = vld [vmem:[%s4 + $0x10] sm:$0xff]
        %v439 = vld [vmem:[%s4 + $0x18] sm:$0xff]
        %v440 = vld [vmem:[%s5] sm:$0x1]
        %v442 = vperm.slane %v440, 0
        %445 = vrot.lane.b32.xlu0 %v435, 91
        %v446 = vpop.permute.xlu0 %445
        %vm447 = vcmask 261120
        %v448 = vsel %vm447, %v446, 0
        %450 = vmatpush.msra.mxu0 0.0
        %451 = vmatpush.msra.mxu0 0.0
        %452 = vmatpush.msra.mxu0 0.0
        %453 = vmatpush.msra.mxu0 0.0
        %454 = vmatpush.msra.mxu0 0.0
        %455 = vmatpush.msra.mxu0 0.0
        %456 = vmatpush.msra.mxu0 0.0
        %457 = vmatpush.msra.mxu0 0.0
        %458 = vmatpush.msra.mxu0 0.0
        %459 = vmatpush.msra.mxu0 0.0
        %460 = vmatpush.msra.mxu0 0.0
        %461 = vmatpush.msra.mxu0 0.0
        %462 = vmatpush.msra.mxu0 %v439
        %463 = vmatpush.msra.mxu0 %v438
        %464 = vmatpush.msra.mxu0 %v437
        %465 = vmatpush.msra.mxu0 %v436
        %466 = vmatmul.f32.gmra.mxu0 %v448
        %v467 = vpop.f32.mrf.mxu0
        %v468 = vadd.f32 %v442, %v467
        %469 = vdwg.mxu0
        %v470 = vld [vmem:[%s6] sm:$0xff]
        %v471 = vld [vmem:[%s6 + $0x8] sm:$0xff]
        %v472 = vld [vmem:[%s6 + $0x10] sm:$0xff]
        %v473 = vld [vmem:[%s6 + $0x18] sm:$0xff]
        %v474 = vld [vmem:[%s6 + $0x20] sm:$0xff]
        %v475 = vld [vmem:[%s6 + $0x28] sm:$0xff]
        %v476 = vld [vmem:[%s6 + $0x30] sm:$0xff]
        %v477 = vld [vmem:[%s6 + $0x38] sm:$0xff]
        %v478 = vld [vmem:[%s6 + $0x40] sm:$0xff]
        %v479 = vld [vmem:[%s6 + $0x48] sm:$0xff]
        %v480 = vld [vmem:[%s6 + $0x50] sm:$0xff]
        %v481 = vld [vmem:[%s6 + $0x58] sm:$0xff]
        %v482 = vld [vmem:[%s6 + $0x60] sm:$0xff]
        %v483 = vld [vmem:[%s6 + $0x68] sm:$0xff]
        %v484 = vld [vmem:[%s6 + $0x70] sm:$0xff]
        %v485 = vld [vmem:[%s6 + $0x78] sm:$0xff]
        %v486 = vld [vmem:[%s7] sm:$0xff]
        %v487 = vld [vmem:[%s7 + $0x8] sm:$0xff]
        %v488 = vld [vmem:[%s7 + $0x10] sm:$0xff]
        %v489 = vld [vmem:[%s7 + $0x18] sm:$0xff]
        %v490 = vld [vmem:[%s7 + $0x20] sm:$0x1f]
        %vm491 = vcmask 302080
        %v493 = vsel %vm491, %v434, 0
        %vm495 = vcmask 1044480
        %v497 = vsel %vm495, %v490, 0
        %499 = vmatpush.msra.mxu0 0.0
        %500 = vmatpush.msra.mxu0 0.0
        %501 = vmatpush.msra.mxu0 0.0
        %502 = vmatpush.msra.mxu0 0.0
        %503 = vmatpush.msra.mxu0 0.0
        %504 = vmatpush.msra.mxu0 0.0
        %505 = vmatpush.msra.mxu0 0.0
        %506 = vmatpush.msra.mxu0 0.0
        %507 = vmatpush.msra.mxu0 0.0
        %508 = vmatpush.msra.mxu0 0.0
        %509 = vmatpush.msra.mxu0 0.0
        %510 = vmatpush.msra.mxu0 %v497
        %511 = vmatpush.msra.mxu0 %v489
        %512 = vmatpush.msra.mxu0 %v488
        %513 = vmatpush.msra.mxu0 %v487
        %514 = vmatpush.msra.mxu0 %v486
        %515 = vmatmul.f32.gmra.mxu0 %v493
        %v516 = vpop.f32.mrf.mxu0
        %v517 = vadd.f32 0.0, %v516
        %518 = vdwg.mxu0
        %519 = vmatpush.msra.mxu0 %v485
        %520 = vmatpush.msra.mxu0 %v484
        %521 = vmatpush.msra.mxu0 %v483
        %522 = vmatpush.msra.mxu0 %v482
        %523 = vmatpush.msra.mxu0 %v481
        %524 = vmatpush.msra.mxu0 %v480
        %525 = vmatpush.msra.mxu0 %v479
        %526 = vmatpush.msra.mxu0 %v478
        %527 = vmatpush.msra.mxu0 %v477
        %528 = vmatpush.msra.mxu0 %v476
        %529 = vmatpush.msra.mxu0 %v475
        %530 = vmatpush.msra.mxu0 %v474
        %531 = vmatpush.msra.mxu0 %v473
        %532 = vmatpush.msra.mxu0 %v472
        %533 = vmatpush.msra.mxu0 %v471
        %534 = vmatpush.msra.mxu0 %v470
        %535 = vmatmul.f32.gmra.mxu0 %v468
        %v536 = vpop.f32.mrf.mxu0
        %v537 = vadd.f32 %v517, %v536
        %538 = vdwg.mxu0
        %v539 = vld [vmem:[#allocation3] sm:$0x1]
        %v541 = vperm.slane %v539, 0
        %v543 = vadd.f32 %v537, %v541
        %v544 = vxor.u32 %v543, 2147483648
        %v545 = vmul.f32 %v544, 1.442695
        %v546 = vpow.pop %v545
        %v547 = vadd.f32 %v546, 1.0
        %v548 = vrcp.pop %v547
        %v549 = vmul.f32 %v547, %v548
        %v550 = vsub.f32 1.0, %v549
        %v551 = vmul.f32 %v548, %v550
        %v552 = vadd.f32 %v548, %v551
        %vm553 = vweird.f32 %v547
        %vm554 = vweird.f32 %v548
        %vm555 = vmor %vm553, %vm554
        %v556 = vsel %vm555, %v548, %v552
        %v557 = vand.u32 2147483647, %v547
        %vm558 = vcmp.eq.f32.partialorder %v557, 8.507059e+37
        %v559 = vand.u32 %v547, 2147483648
        %v560 = vor.u32 1.1754944e-38, %v559
        %v561 = vsel %vm558, %v560, %v556
        %v562 = vmul.f32 1.0, %v561
        %vm563 = vcmask 1024
        %564 = vst.msk [vmem:[%s355] sm:$0x3] %vm563, %v562
      $region64: #{tpu_custom_call.1} parent=55 // pred_fallthru
        _
      %p565 = scmp.lt.s32.totalorder %s26, 1
      %s566 = scalar_select %p565, %s26, 1
      %s567 = smul.addr %s566, 2
      %s568 = scalar_lea.vmem %s9, %s567
      // Predicated region
      $region65: #{tpu_custom_call.1} parent=55 // pred_check
        %p569 = pneg %p248
      $region66: #{tpu_custom_call.1} parent=55 // pred_check_branch
        %571 = sbr.rel (%p569) target = $region68
      $region67: #{tpu_custom_call.1} parent=55 // pred_region
        _
      $region68: #{tpu_custom_call.1} parent=55 // pred_fallthru
        _
    $region56: #{tpu_custom_call.1} parent=5 // pred_fallthru
      _
    %p572 = scmp.le.s32.totalorder 2, %s17
    // Predicated region
    $region69: #{tpu_custom_call.1} parent=5 // pred_check
      %p573 = pneg %p572
    $region70: #{tpu_custom_call.1} parent=5 // pred_check_branch
      %575 = sbr.rel (%p573) target = $region72
    $region71: #{tpu_custom_call.1} parent=5 // pred_region
      %s576 = ssub.s32 %s17, 2
      // Predicated region
      $region73: #{tpu_custom_call.1} parent=71 // pred_check
        %p577 = pneg %p254
      $region74: #{tpu_custom_call.1} parent=71 // pred_check_branch
        %579 = sbr.rel (%p577) target = $region76
      $region75: #{tpu_custom_call.1} parent=71 // pred_region
        %p580 = scmp.lt.s32.totalorder %s28, 1
        %s581 = scalar_select %p580, %s28, 1
        %s582 = smul.addr %s581, 2
        %s583 = scalar_lea.vmem %s9, %s582
      $region76: #{tpu_custom_call.1} parent=71 // pred_fallthru
        _
    $region72: #{tpu_custom_call.1} parent=5 // pred_fallthru
      _
  $region6: #{tpu_custom_call.1} parent=0 // loop_footer
    %s21 = sadd.s32 1, %s17
  $region7: #{tpu_custom_call.1} parent=0 // loop_footer_branch
    %16 = sbr.rel target = $region3
  $region8: #{tpu_custom_call.1} parent=0 // loop_exit
    _

</llo_original>
